<compile_context>
chip_gen: v5e
topology: v5e:2x2
jax: 0.10.0
libtpu: 0.0.40
codegen_flags: <defaults>
</compile_context>

<pallas_src>
import jax
import jax.numpy as jnp
from jax.experimental import pallas as pl
from jax.experimental.pallas import tpu as pltpu

ALPHA = 0.5
BETA = 0.3
GAMMA = 0.2
TRANSACTION_COST = 0.001
RISK_FREE_RATE = 0.0
EPSILON = 1e-8

_MAX_TILE_ROWS = 512          # diminishing returns past ~512-row tiles (≈85% roofline)
_MIN_GRID_STEPS = 4           # guarantee pipeline overlap + v7x megacore sharding


def _vmem_budget():
    """(vmem_limit_bytes, double-buffered input tile budget), generation-aware."""
    try:
        cap = int(pltpu.get_tpu_info().vmem_capacity_bytes)
    except Exception:
        cap = 64 * 1024 * 1024            # smallest current part (v7x per-TC); safe default
    limit = min((cap * 3) // 4, 96 * 1024 * 1024)
    return limit, limit // 2


def _sharpe_terms(pred, inv_t, inv_tm1):
    """Single-pass Sharpe over returns = pred - TC (std is shift-invariant)."""
    s_p = jnp.sum(pred, axis=1, keepdims=True)
    s_p2 = jnp.sum(pred * pred, axis=1, keepdims=True)
    p_mean = s_p * inv_t
    p_var = jnp.maximum(s_p2 - s_p * s_p * inv_t, 0.0) * inv_tm1
    denom = jnp.sqrt(p_var) + EPSILON
    return -(p_mean - TRANSACTION_COST - RISK_FREE_RATE) * pl.reciprocal(denom, approx=True)


def _ral_kernel(pred_ref, target_ref, out_ref):
    """volatility=None path: risk = unbiased std of (pred - target) over time."""
    pred = pred_ref[...].astype(jnp.float32)
    target = target_ref[...].astype(jnp.float32)
    T = pred.shape[1]
    inv_t = jnp.float32(1.0 / T)
    # torch .std() is unbiased (ddof=1); T == 1 yields NaN, matching torch.
    inv_tm1 = jnp.float32(1.0 / (T - 1)) if T > 1 else jnp.float32(float("nan"))

    diff = pred - target
    s_d = jnp.sum(diff, axis=1, keepdims=True)
    s_d2 = jnp.sum(diff * diff, axis=1, keepdims=True)

    prediction_loss = s_d2 * inv_t                                           # [TB,1]
    d_var = jnp.maximum(s_d2 - s_d * s_d * inv_t, 0.0) * inv_tm1
    risk_loss = jnp.sqrt(d_var)                                              # [TB,1]

    sharpe_loss = _sharpe_terms(pred, inv_t, inv_tm1)                        # [TB,1]

    out_ref[...] = ALPHA * prediction_loss + BETA * risk_loss + GAMMA * sharpe_loss


def _ral_vol_kernel(pred_ref, target_ref, vol_ref, out_ref):
    """volatility provided: risk = mean(volatility, axis=1)."""
    pred = pred_ref[...].astype(jnp.float32)
    target = target_ref[...].astype(jnp.float32)
    vol = vol_ref[...].astype(jnp.float32)
    T = pred.shape[1]
    Tv = vol.shape[1]
    inv_t = jnp.float32(1.0 / T)
    inv_tm1 = jnp.float32(1.0 / (T - 1)) if T > 1 else jnp.float32(float("nan"))

    diff = pred - target
    prediction_loss = jnp.sum(diff * diff, axis=1, keepdims=True) * inv_t    # [TB,1]

    if Tv == 1:                       # 1-D volatility path: mean over size-1 axis is identity
        risk_loss = vol
    else:
        risk_loss = jnp.sum(vol, axis=1, keepdims=True) * jnp.float32(1.0 / Tv)

    sharpe_loss = _sharpe_terms(pred, inv_t, inv_tm1)

    out_ref[...] = ALPHA * prediction_loss + BETA * risk_loss + GAMMA * sharpe_loss


def _choose_batch_tile(B, T, Tv, in_dtypes, tile_batch, vmem_tile_budget):
    """Pick the batch tile TB (rows) for the double-buffered BlockSpec pipeline."""
    itemsizes = [jnp.dtype(d).itemsize for d in in_dtypes]
    sub = 16 if min(itemsizes) < 4 else 8                 # sublane granularity

    if tile_batch is not None:
        tb = max(sub, (int(tile_batch) // sub) * sub)
        return B if tb >= B else tb

    per_row = 2 * T * (itemsizes[0] + itemsizes[1])       # pred + target, x2 buffers
    if Tv:
        per_row += 2 * Tv * itemsizes[2]
    per_row += 2 * 4                                      # (TB,1) f32 output, x2 buffers
    tb = vmem_tile_budget // per_row
    tb = max(sub, min(_MAX_TILE_ROWS, (tb // sub) * sub))

    if B >= _MIN_GRID_STEPS * sub:
        # Ensure >=4 grid steps so v7x megacore shards and DMA overlaps compute.
        cap = max(sub, ((-(-B // _MIN_GRID_STEPS)) // sub) * sub)
        tb = min(tb, cap)

    return B if tb >= B else tb


def risk_adjusted_loss(pred, target, volatility=None, reduction="mean", tile_batch=None):
    """Pallas-backed RiskAdjustedLoss.

    pred/target: [B, T]. bf16 inputs are the recommended contract (this loss is
    HBM-bandwidth bound on v5e/v6e/v7x; bf16 halves traffic, accumulation is f32
    inside the kernel). volatility: optional [B, T'] or [B].
    """
    pred = jnp.asarray(pred)
    target = jnp.asarray(target)
    B, T = pred.shape

    vol2d = None
    if volatility is not None:
        volatility = jnp.asarray(volatility)
        vol2d = volatility[:, None] if volatility.ndim == 1 else volatility
    Tv = 0 if vol2d is None else vol2d.shape[1]

    dtypes = [pred.dtype, target.dtype] + ([vol2d.dtype] if vol2d is not None else [])
    vmem_limit, tile_budget = _vmem_budget()
    tb = _choose_batch_tile(B, T, Tv, dtypes, tile_batch, tile_budget)
    grid = (pl.cdiv(B, tb),)                  # ragged last block: OOB rows are discarded

    row_map = lambda i: (i, 0)
    in_specs = [pl.BlockSpec((tb, T), row_map), pl.BlockSpec((tb, T), row_map)]
    args = [pred, target]
    bytes_accessed = B * T * (pred.dtype.itemsize + target.dtype.itemsize) + B * 4
    if vol2d is not None:
        in_specs.append(pl.BlockSpec((tb, Tv), row_map))
        args.append(vol2d)
        bytes_accessed += B * Tv * vol2d.dtype.itemsize
        kernel = _ral_vol_kernel
    else:
        kernel = _ral_kernel

    per_batch = pl.pallas_call(
        kernel,
        grid=grid,
        in_specs=in_specs,
        out_specs=pl.BlockSpec((tb, 1), row_map),
        out_shape=jax.ShapeDtypeStruct((B, 1), jnp.float32),
        compiler_params=pltpu.CompilerParams(
            dimension_semantics=("parallel",),        # megacore sharding on v7x
            vmem_limit_bytes=int(vmem_limit),
        ),
        cost_estimate=pl.CostEstimate(
            flops=10 * B * T,
            transcendentals=3 * B,
            bytes_accessed=int(bytes_accessed),
        ),
    )(*args)

    per_batch = per_batch[:, 0]
    if reduction == "mean":
        return jnp.mean(per_batch)
    elif reduction == "sum":
        return jnp.sum(per_batch)
    elif reduction == "none":
        return per_batch
    else:
        raise ValueError(f"Unknown reduction: {reduction}")


def _reference(pred, target, volatility=None, reduction="mean"):
    """Pure-JAX reference mirroring the PyTorch module (ddof=1 std)."""
    pred = pred.astype(jnp.float32)
    target = target.astype(jnp.float32)
    diff = pred - target
    prediction_loss = jnp.mean(diff * diff, axis=1)
    if volatility is not None:
        volatility = volatility.astype(jnp.float32)
        risk_loss = jnp.mean(volatility, axis=1) if volatility.ndim > 1 else volatility
    else:
        risk_loss = jnp.std(diff, axis=1, ddof=1)
    returns = pred - TRANSACTION_COST
    mean_r = jnp.mean(returns, axis=1)
    std_r = jnp.std(returns, axis=1, ddof=1) + EPSILON
    sharpe_loss = -(mean_r - RISK_FREE_RATE) / std_r
    loss = ALPHA * prediction_loss + BETA * risk_loss + GAMMA * sharpe_loss
    if reduction == "mean":
        return jnp.mean(loss)
    elif reduction == "sum":
        return jnp.sum(loss)
    return loss


if __name__ == "__main__":
    key = jax.random.PRNGKey(0)
    k1, k2, k3, k4, k5 = jax.random.split(key, 5)

    def _check(got, want, rtol=5e-3, atol=2e-5):
        got = jax.block_until_ready(got)
        ok = bool(jnp.all(jnp.isfinite(got))) and bool(
            jnp.allclose(got, want, rtol=rtol, atol=atol))
        assert ok, (got, want)

    # Main case: B=8 rows, T=128 time steps.
    B, T = 8, 128
    pred = 0.01 * jax.random.normal(k1, (B, T), dtype=jnp.float32)
    target = 0.01 * jax.random.normal(k2, (B, T), dtype=jnp.float32)
    volatility = jnp.abs(0.02 * jax.random.normal(k3, (B, T), dtype=jnp.float32))

    # volatility=None path, all reductions.
    loss = risk_adjusted_loss(pred, target)
    jax.block_until_ready(loss)
    _check(loss, _reference(pred, target))
    _check(risk_adjusted_loss(pred, target, reduction="sum"),
           _reference(pred, target, reduction="sum"))
    _check(risk_adjusted_loss(pred, target, reduction="none"),
           _reference(pred, target, reduction="none"))

    # volatility provided: 2-D and 1-D.
    _check(risk_adjusted_loss(pred, target, volatility),
           _reference(pred, target, volatility))
    vol1d = jnp.abs(0.02 * jax.random.normal(k4, (B,), dtype=jnp.float32))
    _check(risk_adjusted_loss(pred, target, vol1d),
           _reference(pred, target, vol1d))

    # Multi-tile + ragged-last-block path (no wrapper padding anymore):
    # B=20 with an 8-row tile -> grid of 3 steps, last block ragged (rows 16..19 valid).
    B2 = 20
    pred2 = 0.01 * jax.random.normal(k5, (B2, T), dtype=jnp.float32)
    target2 = 0.01 * jax.random.normal(k2, (B2, T), dtype=jnp.float32)
    _check(risk_adjusted_loss(pred2, target2, tile_batch=8),
           _reference(pred2, target2))
    _check(risk_adjusted_loss(pred2, target2, tile_batch=8, reduction="none"),
           _reference(pred2, target2, reduction="none"))

    # bf16 inputs (recommended contract: halves HBM traffic); f32 accumulation inside.
    pred_bf = pred.astype(jnp.bfloat16)
    target_bf = target.astype(jnp.bfloat16)
    _check(risk_adjusted_loss(pred_bf, target_bf),
           _reference(pred_bf.astype(jnp.float32), target_bf.astype(jnp.float32)))

    print("KERNEL_OK")
</pallas_src>

<mosaic_0001>
module attributes {stable_mosaic.version = 11 : i64} {
  func.func @_ral_kernel(%arg0: i32, %arg1: memref<8x128xf32, #tpu.memory_space<vmem>>, %arg2: memref<8x128xf32, #tpu.memory_space<vmem>>, %arg3: memref<8x1xf32, #tpu.memory_space<vmem>>) attributes {dimension_semantics = [#tpu.dimension_semantics<parallel>], iteration_bounds = array<i64: 1>, scalar_prefetch = 0 : i64, scratch_operands = 0 : i64, tpu.core_type = #tpu.core_type<tc>, window_params = [{transform_indices = @transform_0, window_bounds = array<i64: 8, 128>}, {transform_indices = @transform_1, window_bounds = array<i64: 8, 128>}, {transform_indices = @transform_2, window_bounds = array<i64: 8, 1>}]} {
    %c0 = arith.constant 0 : index
    %c0_0 = arith.constant 0 : index
    %0 = vector.load %arg1[%c0, %c0_0] : memref<8x128xf32, #tpu.memory_space<vmem>>, vector<8x128xf32>
    %c0_1 = arith.constant 0 : index
    %c0_2 = arith.constant 0 : index
    %1 = vector.load %arg2[%c0_1, %c0_2] : memref<8x128xf32, #tpu.memory_space<vmem>>, vector<8x128xf32>
    %2 = arith.subf %0, %1 : vector<8x128xf32>
    %cst = arith.constant dense<0.000000e+00> : vector<8xf32>
    %3 = vector.multi_reduction <add>, %2, %cst [1] : vector<8x128xf32> to vector<8xf32>
    %4 = vector.shape_cast %3 : vector<8xf32> to vector<8x1xf32>
    %5 = arith.mulf %2, %2 : vector<8x128xf32>
    %cst_3 = arith.constant dense<0.000000e+00> : vector<8xf32>
    %6 = vector.multi_reduction <add>, %5, %cst_3 [1] : vector<8x128xf32> to vector<8xf32>
    %7 = vector.shape_cast %6 : vector<8xf32> to vector<8x1xf32>
    %cst_4 = arith.constant 7.812500e-03 : f32
    %8 = vector.broadcast %cst_4 : f32 to vector<8x1xf32>
    %9 = arith.mulf %7, %8 : vector<8x1xf32>
    %10 = arith.mulf %4, %4 : vector<8x1xf32>
    %cst_5 = arith.constant 7.812500e-03 : f32
    %11 = vector.broadcast %cst_5 : f32 to vector<8x1xf32>
    %12 = arith.mulf %10, %11 : vector<8x1xf32>
    %13 = arith.subf %7, %12 : vector<8x1xf32>
    %cst_6 = arith.constant 0.000000e+00 : f32
    %14 = vector.broadcast %cst_6 : f32 to vector<8x1xf32>
    %15 = arith.maximumf %13, %14 : vector<8x1xf32>
    %cst_7 = arith.constant 0.00787401571 : f32
    %16 = vector.broadcast %cst_7 : f32 to vector<8x1xf32>
    %17 = arith.mulf %15, %16 : vector<8x1xf32>
    %18 = math.sqrt %17 : vector<8x1xf32>
    %cst_8 = arith.constant dense<0.000000e+00> : vector<8xf32>
    %19 = vector.multi_reduction <add>, %0, %cst_8 [1] : vector<8x128xf32> to vector<8xf32>
    %20 = vector.shape_cast %19 : vector<8xf32> to vector<8x1xf32>
    %21 = arith.mulf %0, %0 : vector<8x128xf32>
    %cst_9 = arith.constant dense<0.000000e+00> : vector<8xf32>
    %22 = vector.multi_reduction <add>, %21, %cst_9 [1] : vector<8x128xf32> to vector<8xf32>
    %23 = vector.shape_cast %22 : vector<8xf32> to vector<8x1xf32>
    %cst_10 = arith.constant 7.812500e-03 : f32
    %24 = vector.broadcast %cst_10 : f32 to vector<8x1xf32>
    %25 = arith.mulf %20, %24 : vector<8x1xf32>
    %26 = arith.mulf %20, %20 : vector<8x1xf32>
    %cst_11 = arith.constant 7.812500e-03 : f32
    %27 = vector.broadcast %cst_11 : f32 to vector<8x1xf32>
    %28 = arith.mulf %26, %27 : vector<8x1xf32>
    %29 = arith.subf %23, %28 : vector<8x1xf32>
    %cst_12 = arith.constant 0.000000e+00 : f32
    %30 = vector.broadcast %cst_12 : f32 to vector<8x1xf32>
    %31 = arith.maximumf %29, %30 : vector<8x1xf32>
    %cst_13 = arith.constant 0.00787401571 : f32
    %32 = vector.broadcast %cst_13 : f32 to vector<8x1xf32>
    %33 = arith.mulf %31, %32 : vector<8x1xf32>
    %34 = math.sqrt %33 : vector<8x1xf32>
    %cst_14 = arith.constant 9.99999993E-9 : f32
    %35 = vector.broadcast %cst_14 : f32 to vector<8x1xf32>
    %36 = arith.addf %34, %35 : vector<8x1xf32>
    %cst_15 = arith.constant 1.000000e-03 : f32
    %37 = vector.broadcast %cst_15 : f32 to vector<8x1xf32>
    %38 = arith.subf %25, %37 : vector<8x1xf32>
    %cst_16 = arith.constant 0.000000e+00 : f32
    %39 = vector.broadcast %cst_16 : f32 to vector<8x1xf32>
    %40 = arith.subf %38, %39 : vector<8x1xf32>
    %cst_17 = arith.constant 0.000000e+00 : f32
    %41 = vector.broadcast %cst_17 : f32 to vector<8x1xf32>
    %42 = arith.subf %41, %40 : vector<8x1xf32>
    %43 = tpu.reciprocal %36 {approx = true} : vector<8x1xf32> -> vector<8x1xf32>
    %44 = arith.mulf %42, %43 : vector<8x1xf32>
    %cst_18 = arith.constant 5.000000e-01 : f32
    %45 = vector.broadcast %cst_18 : f32 to vector<8x1xf32>
    %46 = arith.mulf %45, %9 : vector<8x1xf32>
    %cst_19 = arith.constant 3.000000e-01 : f32
    %47 = vector.broadcast %cst_19 : f32 to vector<8x1xf32>
    %48 = arith.mulf %47, %18 : vector<8x1xf32>
    %49 = arith.addf %46, %48 : vector<8x1xf32>
    %cst_20 = arith.constant 2.000000e-01 : f32
    %50 = vector.broadcast %cst_20 : f32 to vector<8x1xf32>
    %51 = arith.mulf %50, %44 : vector<8x1xf32>
    %52 = arith.addf %49, %51 : vector<8x1xf32>
    %c0_21 = arith.constant 0 : index
    %c0_22 = arith.constant 0 : index
    %53 = vector.load %arg3[%c0_21, %c0_22] : memref<8x1xf32, #tpu.memory_space<vmem>>, vector<8x1xf32>
    tpu.vector_store %arg3[%c0_21, %c0_22], %52 {strides = array<i32>} : memref<8x1xf32, #tpu.memory_space<vmem>>, vector<8x1xf32>,
    return
  }
  func.func @transform_0(%arg0: i32) -> (i32, i32) {
    %c0_i32 = arith.constant 0 : i32
    %c0_i32_0 = arith.constant 0 : i32
    return %arg0, %c0_i32 : i32, i32
  }
  func.func @transform_1(%arg0: i32) -> (i32, i32) {
    %c0_i32 = arith.constant 0 : i32
    %c0_i32_0 = arith.constant 0 : i32
    return %arg0, %c0_i32 : i32, i32
  }
  func.func @transform_2(%arg0: i32) -> (i32, i32) {
    %c0_i32 = arith.constant 0 : i32
    %c0_i32_0 = arith.constant 0 : i32
    return %arg0, %c0_i32 : i32, i32
  }
}

</mosaic_0001>

<llo_original>
// kernel: tpu_custom_call.1
$region0: #{tpu_custom_call.1}
  #allocation0 [shape = 'u32[]', space=smem, size = 0x4, offset = 0x4, fixed_abs, tag = 'smem constant byte address 0x4 - core index']
  #allocation1 [shape = 'u32[72,128]{1,0:T(1,128)}', space=vmem, size = 0x9000, scoped, tag = 'internal scratch']
  %s0 = inlined_call_operand.hbm [shape: f32[8,128], index: 0, kind: input, shape index: {}]
  %s1 = inlined_call_operand.hbm [shape: f32[8,128], index: 1, kind: input, shape index: {}]
  %s2 = inlined_call_operand.vmem [shape: f32[8,1], index: 2, kind: output, shape index: {}]
  %s3 = sld [smem:[#allocation0]]
  $region26: #{tpu_custom_call.1} parent=0
    _
  %s5 = ssub.s32 1, %s3
  %s6 = scalar_select 0, %s5, %s3
  $region1: #{tpu_custom_call.1} parent=0
    #allocation2 [shape = 'u8[4096]{0}', space=vmem, size = 0x1000, scoped, tag = 'input window, operand 0, single buffered']
    #allocation3 [shape = 's32[1]{0}', space=sflag, size = 0x4, scoped, tag = 'scoped memory for tpu_custom_call.1']
    #allocation4 [shape = 'u8[4096]{0}', space=vmem, size = 0x1000, scoped, tag = 'input window, operand 1, single buffered']
    #allocation5 [shape = 's32[1]{0}', space=sflag, size = 0x4, scoped, tag = 'scoped memory for tpu_custom_call.1']
    %7 = vsyncpa [#allocation3], 0
    %8 = vsyncpa [#allocation5], 0
    // Predicated region
    $region2: #{tpu_custom_call.1} parent=1 // pred_check
      _
    $region3: #{tpu_custom_call.1} parent=1 // pred_check_branch
      %10 = sbr.rel (0) target = $region5
    $region4: #{tpu_custom_call.1} parent=1 // pred_region
      %12 = vsyncadd [#allocation3], 0
      %s14 = sshll.u32 %s0, 4
      %s15 = int_to_ptr.hbm [resolvable:$true] %s14
      %s16 = sshll.u32 [#allocation2], 4
      %s17 = int_to_ptr.vmem [resolvable:$true] %s16
      %19 = dma.hbm_to_vmem [thread:$0]  %s15, 128, %s17, [#allocation3]
    $region5: #{tpu_custom_call.1} parent=1 // pred_fallthru
      _
    // Predicated region
    $region6: #{tpu_custom_call.1} parent=1 // pred_check
      _
    $region7: #{tpu_custom_call.1} parent=1 // pred_check_branch
      %21 = sbr.rel (0) target = $region9
    $region8: #{tpu_custom_call.1} parent=1 // pred_region
      %23 = vsyncadd [#allocation5], 0
      %s25 = sshll.u32 %s1, 4
      %s26 = int_to_ptr.hbm [resolvable:$true] %s25
      %s27 = sshll.u32 [#allocation4], 4
      %s28 = int_to_ptr.vmem [resolvable:$true] %s27
      %30 = dma.hbm_to_vmem [thread:$0]  %s26, 128, %s28, [#allocation5]
    $region9: #{tpu_custom_call.1} parent=1 // pred_fallthru
      _
    // Predicated region
    $region10: #{tpu_custom_call.1} parent=1 // pred_check
      _
    $region11: #{tpu_custom_call.1} parent=1 // pred_check_branch
      %32 = sbr.rel (0) target = $region13
    $region12: #{tpu_custom_call.1} parent=1 // pred_region
      %34 = dma.done [#allocation3], 128
    $region13: #{tpu_custom_call.1} parent=1 // pred_fallthru
      _
    // Predicated region
    $region14: #{tpu_custom_call.1} parent=1 // pred_check
      _
    $region15: #{tpu_custom_call.1} parent=1 // pred_check_branch
      %36 = sbr.rel (0) target = $region17
    $region16: #{tpu_custom_call.1} parent=1 // pred_region
      %38 = dma.done [#allocation5], 128
    $region17: #{tpu_custom_call.1} parent=1 // pred_fallthru
      _
    %v39 = vld [vmem:[#allocation2] sm:$0xff]
    %v40 = vld [vmem:[#allocation4] sm:$0xff]
    %v41 = vsub.f32 %v39, %v40
    %42 = vadd.xlane.f32.xlu0 %v41
    %v43 = vpop.xlane.xlu0 %42
    %v44 = vmul.f32 %v41, %v41
    %45 = vadd.xlane.f32.xlu0 %v44
    %v46 = vpop.xlane.xlu0 %45
    %v47 = vmul.f32 %v46, 0.0078125
    %v48 = vmul.f32 %v43, %v43
    %v49 = vmul.f32 %v48, 0.0078125
    %v50 = vsub.f32 %v46, %v49
    %v51 = vmax.f32 %v50, 0.0
    %v52 = vmul.f32 %v51, 0.007874016
    %v53 = vrsqrt.pop %v52
    %v54 = vmul.f32 %v53, %v52
    %v55 = vmul.f32 %v54, %v53
    %v56 = vmul.f32 0.5, %v55
    %v57 = vsub.f32 1.5, %v56
    %v58 = vmul.f32 %v53, %v57
    %v59 = vmul.f32 %v52, %v58
    %vm60 = vcmp.eq.f32.partialorder %v52, inf
    %v61 = vsel %vm60, %v52, %v59
    %vm62 = vcmp.eq.f32.partialorder %v52, 0.0
    %v63 = vand.u32 %v52, 2147483648
    %v64 = vsel %vm62, %v63, %v61
    %65 = vadd.xlane.f32.xlu0 %v39
    %v66 = vpop.xlane.xlu0 %65
    %v67 = vmul.f32 %v39, %v39
    %68 = vadd.xlane.f32.xlu0 %v67
    %v69 = vpop.xlane.xlu0 %68
    %v70 = vmul.f32 %v66, 0.0078125
    %v71 = vmul.f32 %v66, %v66
    %v72 = vmul.f32 %v71, 0.0078125
    %v73 = vsub.f32 %v69, %v72
    %v74 = vmax.f32 %v73, 0.0
    %v75 = vmul.f32 %v74, 0.007874016
    %v76 = vrsqrt.pop %v75
    %v77 = vmul.f32 %v76, %v75
    %v78 = vmul.f32 %v77, %v76
    %v79 = vmul.f32 0.5, %v78
    %v80 = vsub.f32 1.5, %v79
    %v81 = vmul.f32 %v76, %v80
    %v82 = vmul.f32 %v75, %v81
    %vm83 = vcmp.eq.f32.partialorder %v75, inf
    %v84 = vsel %vm83, %v75, %v82
    %vm85 = vcmp.eq.f32.partialorder %v75, 0.0
    %v86 = vand.u32 %v75, 2147483648
    %v87 = vsel %vm85, %v86, %v84
    %v88 = vadd.f32 %v87, 1e-08
    %v89 = vsub.f32 %v70, 0.001
    %v90 = vsub.f32 0.0, %v89
    %v91 = vrcp.pop %v88
    %v92 = vmul.f32 %v90, %v91
    %v93 = vmul.f32 %v47, 0.5
    %v94 = vmul.f32 %v64, 0.3
    %v95 = vadd.f32 %v93, %v94
    %v96 = vmul.f32 %v92, 0.2
    %v97 = vadd.f32 %v95, %v96
    %vm98 = vcmask 7168
    %99 = vst.msk [vmem:[%s2] sm:$0xff] %vm98, %v97
    // Predicated region
    $region18: #{tpu_custom_call.1} parent=1 // pred_check
      _
    $region19: #{tpu_custom_call.1} parent=1 // pred_check_branch
      %101 = sbr.rel (0) target = $region21
    $region20: #{tpu_custom_call.1} parent=1 // pred_region
      _
    $region21: #{tpu_custom_call.1} parent=1 // pred_fallthru
      _
    // Predicated region
    $region22: #{tpu_custom_call.1} parent=1 // pred_check
      _
    $region23: #{tpu_custom_call.1} parent=1 // pred_check_branch
      %103 = sbr.rel (0) target = $region25
    $region24: #{tpu_custom_call.1} parent=1 // pred_region
      _
    $region25: #{tpu_custom_call.1} parent=1 // pred_fallthru
      _
    %104 = vsyncpa [#allocation3], 1
    %105 = vsyncpa [#allocation5], 1

</llo_original>
